<compile_context>
chip_gen: v5e
topology: v5e:2x2
jax: 0.10.0
libtpu: 0.0.40
codegen_flags: <defaults>
</compile_context>

<pallas_src>
import jax
import jax.numpy as jnp
from jax.experimental import pallas as pl
from jax.experimental.pallas import tpu as pltpu

# ----------------------------- model hyperparams -----------------------------
IM_DIM = 16       # hp.imDim  (inDim == outDim)
LATENT_DIM = 8    # hp.latentDim
H1, H2 = 64, 32   # hidden widths from the module definition
_MAX_TILE = 1024  # rows per grid step cap (1024x64 f32 activations = 256 KiB)


# --------------------------------- kernels -----------------------------------
def _enc_dec_kernel(x_ref,
                    w1, b1, w2, b2, w3, b3,          # encoder params
                    w4, b4, w5, b5, w6, b6,          # decoder params
                    z_ref, y_ref):
    """Fused encoder + decoder MLP for one batch tile (hot path)."""
    x = x_ref[...]
    # hoist the tiny (1, N) bias loads once per grid step
    b1v, b2v, b3v = b1[...], b2[...], b3[...]
    b4v, b5v, b6v = b4[...], b5[...], b6[...]

    h = jnp.maximum(jnp.dot(x, w1[...], preferred_element_type=jnp.float32) + b1v, 0.0)
    h = jnp.maximum(jnp.dot(h, w2[...], preferred_element_type=jnp.float32) + b2v, 0.0)
    y = jnp.dot(h, w3[...], preferred_element_type=jnp.float32) + b3v

    d = jnp.maximum(jnp.dot(y, w4[...], preferred_element_type=jnp.float32) + b4v, 0.0)
    d = jnp.maximum(jnp.dot(d, w5[...], preferred_element_type=jnp.float32) + b5v, 0.0)
    z = jnp.dot(d, w6[...], preferred_element_type=jnp.float32) + b6v

    z_ref[...] = z.astype(z_ref.dtype)
    y_ref[...] = y.astype(y_ref.dtype)


def _dec_kernel(x_ref, w4, b4, w5, b5, w6, b6, z_ref):
    """Decoder-only MLP for one batch tile (latent-dim input branch)."""
    b4v, b5v, b6v = b4[...], b5[...], b6[...]
    d = jnp.maximum(jnp.dot(x_ref[...], w4[...], preferred_element_type=jnp.float32) + b4v, 0.0)
    d = jnp.maximum(jnp.dot(d, w5[...], preferred_element_type=jnp.float32) + b5v, 0.0)
    z = jnp.dot(d, w6[...], preferred_element_type=jnp.float32) + b6v
    z_ref[...] = z.astype(z_ref.dtype)


# ------------------------------ spec helpers ----------------------------------
def _full_spec(shape):
    # whole-array block, same block every grid step (weights / biases):
    # DMA'd once, never re-fetched.
    nd = len(shape)
    return pl.BlockSpec(shape, lambda i, _nd=nd: (0,) * _nd)


def _batch_spec(tile, feat):
    # tile over batch rows, full feature width
    return pl.BlockSpec((tile, feat), lambda i: (i, 0))


def _pick_tile(B):
    """Large, sublane-aligned batch tile; >=2 grid steps when the batch allows
    (so v7x can shard the 'parallel' axis over its two TensorCores)."""
    half = -(-B // 2)                       # cdiv(B, 2)
    tile = min(_MAX_TILE, max(8, half))
    return ((tile + 7) // 8) * 8            # round up to sublane multiple


def _pad_rows(x, tile):
    B = x.shape[0]
    Bp = ((B + tile - 1) // tile) * tile
    if Bp != B:
        x = jnp.pad(x, ((0, Bp - B), (0, 0)))
    return x, B, Bp


# ------------------------------ pallas wrappers -------------------------------
@jax.jit
def encode_decode(x, params):
    """x: (B, IM_DIM) -> (z: (B, IM_DIM), y: (B, LATENT_DIM))"""
    tile = _pick_tile(x.shape[0])
    x, B, Bp = _pad_rows(x, tile)
    (w1, b1), (w2, b2), (w3, b3), (w4, b4), (w5, b5), (w6, b6) = params

    in_specs = [_batch_spec(tile, IM_DIM)]
    for w, b in params:
        in_specs.append(_full_spec(w.shape))
        in_specs.append(_full_spec(b.shape))

    z, y = pl.pallas_call(
        _enc_dec_kernel,
        out_shape=(jax.ShapeDtypeStruct((Bp, IM_DIM), x.dtype),
                   jax.ShapeDtypeStruct((Bp, LATENT_DIM), x.dtype)),
        grid_spec=pltpu.PrefetchScalarGridSpec(
            num_scalar_prefetch=0,
            grid=(Bp // tile,),
            in_specs=in_specs,
            out_specs=[_batch_spec(tile, IM_DIM), _batch_spec(tile, LATENT_DIM)],
        ),
        compiler_params=pltpu.CompilerParams(dimension_semantics=("parallel",)),
    )(x, w1, b1, w2, b2, w3, b3, w4, b4, w5, b5, w6, b6)
    return z[:B], y[:B]


@jax.jit
def decode(x, params):
    """x: (B, LATENT_DIM) -> z: (B, IM_DIM)"""
    tile = _pick_tile(x.shape[0])
    x, B, Bp = _pad_rows(x, tile)
    (_, _), (_, _), (_, _), (w4, b4), (w5, b5), (w6, b6) = params

    in_specs = [_batch_spec(tile, LATENT_DIM)]
    for w, b in ((w4, b4), (w5, b5), (w6, b6)):
        in_specs.append(_full_spec(w.shape))
        in_specs.append(_full_spec(b.shape))

    z = pl.pallas_call(
        _dec_kernel,
        out_shape=jax.ShapeDtypeStruct((Bp, IM_DIM), x.dtype),
        grid_spec=pltpu.PrefetchScalarGridSpec(
            num_scalar_prefetch=0,
            grid=(Bp // tile,),
            in_specs=in_specs,
            out_specs=_batch_spec(tile, IM_DIM),
        ),
        compiler_params=pltpu.CompilerParams(dimension_semantics=("parallel",)),
    )(x, w4, b4, w5, b5, w6, b6)
    return z[:B]


def autoencoder_forward(x, params):
    """Mirrors AutoEncoder.forward branching on the last dim of x."""
    if x.shape[-1] == LATENT_DIM:
        return decode(x, params)
    z, y = encode_decode(x, params)
    return (z, y)


# --------------------------- deterministic params -----------------------------
def init_params(key):
    """nn.Linear-style init: U(-1/sqrt(fan_in), 1/sqrt(fan_in)). W is (in, out)."""
    dims = [(IM_DIM, H1), (H1, H2), (H2, LATENT_DIM),          # encoder
            (LATENT_DIM, H2), (H2, H1), (H1, IM_DIM)]          # decoder
    params = []
    for (fan_in, fan_out) in dims:
        key, kw, kb = jax.random.split(key, 3)
        bound = 1.0 / jnp.sqrt(float(fan_in))
        w = jax.random.uniform(kw, (fan_in, fan_out), jnp.float32, -bound, bound)
        b = jax.random.uniform(kb, (1, fan_out), jnp.float32, -bound, bound)
        params.append((w, b))
    return params


# ------------------------------- reference ------------------------------------
def _ref_forward(x, params):
    (w1, b1), (w2, b2), (w3, b3), (w4, b4), (w5, b5), (w6, b6) = params

    def dec(v):
        d = jnp.maximum(v @ w4 + b4, 0.0)
        d = jnp.maximum(d @ w5 + b5, 0.0)
        return d @ w6 + b6

    if x.shape[-1] == LATENT_DIM:
        return dec(x)
    h = jnp.maximum(x @ w1 + b1, 0.0)
    h = jnp.maximum(h @ w2 + b2, 0.0)
    y = h @ w3 + b3
    return dec(y), y


# --------------------------------- main ---------------------------------------
if __name__ == "__main__":
    key = jax.random.PRNGKey(0)
    kp, kx, kl = jax.random.split(key, 3)

    params = init_params(kp)

    # full autoencoder path: x has shape (B, imDim); B not a multiple of the
    # tile exercises the padded-tail path and a >=2-step grid.
    B = 20
    x_img = jax.random.normal(kx, (B, IM_DIM), jnp.float32)
    z, y = autoencoder_forward(x_img, params)
    z = jax.block_until_ready(z)
    y = jax.block_until_ready(y)

    # decoder-only path: x has shape (B2, latentDim)
    B2 = 8
    x_lat = jax.random.normal(kl, (B2, LATENT_DIM), jnp.float32)
    z_only = jax.block_until_ready(autoencoder_forward(x_lat, params))

    # correctness check against pure-JAX reference
    z_ref, y_ref = _ref_forward(x_img, params)
    z_only_ref = _ref_forward(x_lat, params)
    assert jnp.allclose(z, z_ref, atol=1e-5, rtol=1e-5)
    assert jnp.allclose(y, y_ref, atol=1e-5, rtol=1e-5)
    assert jnp.allclose(z_only, z_only_ref, atol=1e-5, rtol=1e-5)
    assert z.shape == (B, IM_DIM) and y.shape == (B, LATENT_DIM)
    assert z_only.shape == (B2, IM_DIM)

    print("KERNEL_OK")
</pallas_src>

<mosaic_0001>
module attributes {stable_mosaic.version = 11 : i64} {
  func.func @_enc_dec_kernel(%arg0: i32, %arg1: memref<16x16xf32, #tpu.memory_space<vmem>>, %arg2: memref<16x64xf32, #tpu.memory_space<vmem>>, %arg3: memref<1x64xf32, #tpu.memory_space<vmem>>, %arg4: memref<64x32xf32, #tpu.memory_space<vmem>>, %arg5: memref<1x32xf32, #tpu.memory_space<vmem>>, %arg6: memref<32x8xf32, #tpu.memory_space<vmem>>, %arg7: memref<1x8xf32, #tpu.memory_space<vmem>>, %arg8: memref<8x32xf32, #tpu.memory_space<vmem>>, %arg9: memref<1x32xf32, #tpu.memory_space<vmem>>, %arg10: memref<32x64xf32, #tpu.memory_space<vmem>>, %arg11: memref<1x64xf32, #tpu.memory_space<vmem>>, %arg12: memref<64x16xf32, #tpu.memory_space<vmem>>, %arg13: memref<1x16xf32, #tpu.memory_space<vmem>>, %arg14: memref<16x16xf32, #tpu.memory_space<vmem>>, %arg15: memref<16x8xf32, #tpu.memory_space<vmem>>) attributes {dimension_semantics = [#tpu.dimension_semantics<parallel>], iteration_bounds = array<i64: 2>, scalar_prefetch = 0 : i64, scratch_operands = 0 : i64, tpu.core_type = #tpu.core_type<tc>, window_params = [{transform_indices = @transform_0, window_bounds = array<i64: 16, 16>}, {pipeline_mode = #tpu.pipeline_mode<synchronous>, transform_indices = @transform_1, window_bounds = array<i64: 16, 64>}, {pipeline_mode = #tpu.pipeline_mode<synchronous>, transform_indices = @transform_2, window_bounds = array<i64: 1, 64>}, {pipeline_mode = #tpu.pipeline_mode<synchronous>, transform_indices = @transform_3, window_bounds = array<i64: 64, 32>}, {pipeline_mode = #tpu.pipeline_mode<synchronous>, transform_indices = @transform_4, window_bounds = array<i64: 1, 32>}, {pipeline_mode = #tpu.pipeline_mode<synchronous>, transform_indices = @transform_5, window_bounds = array<i64: 32, 8>}, {pipeline_mode = #tpu.pipeline_mode<synchronous>, transform_indices = @transform_6, window_bounds = array<i64: 1, 8>}, {pipeline_mode = #tpu.pipeline_mode<synchronous>, transform_indices = @transform_7, window_bounds = array<i64: 8, 32>}, {pipeline_mode = #tpu.pipeline_mode<synchronous>, transform_indices = @transform_8, window_bounds = array<i64: 1, 32>}, {pipeline_mode = #tpu.pipeline_mode<synchronous>, transform_indices = @transform_9, window_bounds = array<i64: 32, 64>}, {pipeline_mode = #tpu.pipeline_mode<synchronous>, transform_indices = @transform_10, window_bounds = array<i64: 1, 64>}, {pipeline_mode = #tpu.pipeline_mode<synchronous>, transform_indices = @transform_11, window_bounds = array<i64: 64, 16>}, {pipeline_mode = #tpu.pipeline_mode<synchronous>, transform_indices = @transform_12, window_bounds = array<i64: 1, 16>}, {transform_indices = @transform_13, window_bounds = array<i64: 16, 16>}, {transform_indices = @transform_14, window_bounds = array<i64: 16, 8>}]} {
    %c0 = arith.constant 0 : index
    %c0_0 = arith.constant 0 : index
    %0 = vector.load %arg1[%c0, %c0_0] : memref<16x16xf32, #tpu.memory_space<vmem>>, vector<16x16xf32>
    %c0_1 = arith.constant 0 : index
    %c0_2 = arith.constant 0 : index
    %1 = vector.load %arg3[%c0_1, %c0_2] : memref<1x64xf32, #tpu.memory_space<vmem>>, vector<1x64xf32>
    %c0_3 = arith.constant 0 : index
    %c0_4 = arith.constant 0 : index
    %2 = vector.load %arg5[%c0_3, %c0_4] : memref<1x32xf32, #tpu.memory_space<vmem>>, vector<1x32xf32>
    %c0_5 = arith.constant 0 : index
    %c0_6 = arith.constant 0 : index
    %3 = vector.load %arg7[%c0_5, %c0_6] : memref<1x8xf32, #tpu.memory_space<vmem>>, vector<1x8xf32>
    %c0_7 = arith.constant 0 : index
    %c0_8 = arith.constant 0 : index
    %4 = vector.load %arg9[%c0_7, %c0_8] : memref<1x32xf32, #tpu.memory_space<vmem>>, vector<1x32xf32>
    %c0_9 = arith.constant 0 : index
    %c0_10 = arith.constant 0 : index
    %5 = vector.load %arg11[%c0_9, %c0_10] : memref<1x64xf32, #tpu.memory_space<vmem>>, vector<1x64xf32>
    %c0_11 = arith.constant 0 : index
    %c0_12 = arith.constant 0 : index
    %6 = vector.load %arg13[%c0_11, %c0_12] : memref<1x16xf32, #tpu.memory_space<vmem>>, vector<1x16xf32>
    %c0_13 = arith.constant 0 : index
    %c0_14 = arith.constant 0 : index
    %7 = vector.load %arg2[%c0_13, %c0_14] : memref<16x64xf32, #tpu.memory_space<vmem>>, vector<16x64xf32>
    %cst = arith.constant dense<0.000000e+00> : vector<16x64xf32>
    %8 = tpu.matmul %0, %7, %cst {dimension_numbers = #tpu.dot_dimension_numbers<[1], [0], [0], [1], [0, 0, 1, 1], [], []>} : vector<16x16xf32>, vector<16x64xf32>, vector<16x64xf32> -> vector<16x64xf32>
    %9 = vector.broadcast %1 : vector<1x64xf32> to vector<16x64xf32>
    %10 = arith.addf %8, %9 : vector<16x64xf32>
    %cst_15 = arith.constant 0.000000e+00 : f32
    %11 = vector.broadcast %cst_15 : f32 to vector<16x64xf32>
    %12 = arith.maximumf %10, %11 : vector<16x64xf32>
    %c0_16 = arith.constant 0 : index
    %c0_17 = arith.constant 0 : index
    %13 = vector.load %arg4[%c0_16, %c0_17] : memref<64x32xf32, #tpu.memory_space<vmem>>, vector<64x32xf32>
    %cst_18 = arith.constant dense<0.000000e+00> : vector<16x32xf32>
    %14 = tpu.matmul %12, %13, %cst_18 {dimension_numbers = #tpu.dot_dimension_numbers<[1], [0], [0], [1], [0, 0, 1, 1], [], []>} : vector<16x64xf32>, vector<64x32xf32>, vector<16x32xf32> -> vector<16x32xf32>
    %15 = vector.broadcast %2 : vector<1x32xf32> to vector<16x32xf32>
    %16 = arith.addf %14, %15 : vector<16x32xf32>
    %cst_19 = arith.constant 0.000000e+00 : f32
    %17 = vector.broadcast %cst_19 : f32 to vector<16x32xf32>
    %18 = arith.maximumf %16, %17 : vector<16x32xf32>
    %c0_20 = arith.constant 0 : index
    %c0_21 = arith.constant 0 : index
    %19 = vector.load %arg6[%c0_20, %c0_21] : memref<32x8xf32, #tpu.memory_space<vmem>>, vector<32x8xf32>
    %cst_22 = arith.constant dense<0.000000e+00> : vector<16x8xf32>
    %20 = tpu.matmul %18, %19, %cst_22 {dimension_numbers = #tpu.dot_dimension_numbers<[1], [0], [0], [1], [0, 0, 1, 1], [], []>} : vector<16x32xf32>, vector<32x8xf32>, vector<16x8xf32> -> vector<16x8xf32>
    %21 = vector.broadcast %3 : vector<1x8xf32> to vector<16x8xf32>
    %22 = arith.addf %20, %21 : vector<16x8xf32>
    %c0_23 = arith.constant 0 : index
    %c0_24 = arith.constant 0 : index
    %23 = vector.load %arg8[%c0_23, %c0_24] : memref<8x32xf32, #tpu.memory_space<vmem>>, vector<8x32xf32>
    %cst_25 = arith.constant dense<0.000000e+00> : vector<16x32xf32>
    %24 = tpu.matmul %22, %23, %cst_25 {dimension_numbers = #tpu.dot_dimension_numbers<[1], [0], [0], [1], [0, 0, 1, 1], [], []>} : vector<16x8xf32>, vector<8x32xf32>, vector<16x32xf32> -> vector<16x32xf32>
    %25 = vector.broadcast %4 : vector<1x32xf32> to vector<16x32xf32>
    %26 = arith.addf %24, %25 : vector<16x32xf32>
    %cst_26 = arith.constant 0.000000e+00 : f32
    %27 = vector.broadcast %cst_26 : f32 to vector<16x32xf32>
    %28 = arith.maximumf %26, %27 : vector<16x32xf32>
    %c0_27 = arith.constant 0 : index
    %c0_28 = arith.constant 0 : index
    %29 = vector.load %arg10[%c0_27, %c0_28] : memref<32x64xf32, #tpu.memory_space<vmem>>, vector<32x64xf32>
    %cst_29 = arith.constant dense<0.000000e+00> : vector<16x64xf32>
    %30 = tpu.matmul %28, %29, %cst_29 {dimension_numbers = #tpu.dot_dimension_numbers<[1], [0], [0], [1], [0, 0, 1, 1], [], []>} : vector<16x32xf32>, vector<32x64xf32>, vector<16x64xf32> -> vector<16x64xf32>
    %31 = vector.broadcast %5 : vector<1x64xf32> to vector<16x64xf32>
    %32 = arith.addf %30, %31 : vector<16x64xf32>
    %cst_30 = arith.constant 0.000000e+00 : f32
    %33 = vector.broadcast %cst_30 : f32 to vector<16x64xf32>
    %34 = arith.maximumf %32, %33 : vector<16x64xf32>
    %c0_31 = arith.constant 0 : index
    %c0_32 = arith.constant 0 : index
    %35 = vector.load %arg12[%c0_31, %c0_32] : memref<64x16xf32, #tpu.memory_space<vmem>>, vector<64x16xf32>
    %cst_33 = arith.constant dense<0.000000e+00> : vector<16x16xf32>
    %36 = tpu.matmul %34, %35, %cst_33 {dimension_numbers = #tpu.dot_dimension_numbers<[1], [0], [0], [1], [0, 0, 1, 1], [], []>} : vector<16x64xf32>, vector<64x16xf32>, vector<16x16xf32> -> vector<16x16xf32>
    %37 = vector.broadcast %6 : vector<1x16xf32> to vector<16x16xf32>
    %38 = arith.addf %36, %37 : vector<16x16xf32>
    %c0_34 = arith.constant 0 : index
    %c0_35 = arith.constant 0 : index
    %39 = vector.load %arg14[%c0_34, %c0_35] : memref<16x16xf32, #tpu.memory_space<vmem>>, vector<16x16xf32>
    tpu.vector_store %arg14[%c0_34, %c0_35], %38 {strides = array<i32>} : memref<16x16xf32, #tpu.memory_space<vmem>>, vector<16x16xf32>,
    %c0_36 = arith.constant 0 : index
    %c0_37 = arith.constant 0 : index
    %40 = vector.load %arg15[%c0_36, %c0_37] : memref<16x8xf32, #tpu.memory_space<vmem>>, vector<16x8xf32>
    tpu.vector_store %arg15[%c0_36, %c0_37], %22 {strides = array<i32>} : memref<16x8xf32, #tpu.memory_space<vmem>>, vector<16x8xf32>,
    return
  }
  func.func @transform_0(%arg0: i32) -> (i32, i32) {
    %c0_i32 = arith.constant 0 : i32
    %c0_i32_0 = arith.constant 0 : i32
    return %arg0, %c0_i32 : i32, i32
  }
  func.func @transform_1(%arg0: i32) -> (i32, i32) {
    %c0_i32 = arith.constant 0 : i32
    %c0_i32_0 = arith.constant 0 : i32
    %c0_i32_1 = arith.constant 0 : i32
    return %c0_i32, %c0_i32_0 : i32, i32
  }
  func.func @transform_2(%arg0: i32) -> (i32, i32) {
    %c0_i32 = arith.constant 0 : i32
    %c0_i32_0 = arith.constant 0 : i32
    %c0_i32_1 = arith.constant 0 : i32
    return %c0_i32, %c0_i32_0 : i32, i32
  }
  func.func @transform_3(%arg0: i32) -> (i32, i32) {
    %c0_i32 = arith.constant 0 : i32
    %c0_i32_0 = arith.constant 0 : i32
    %c0_i32_1 = arith.constant 0 : i32
    return %c0_i32, %c0_i32_0 : i32, i32
  }
  func.func @transform_4(%arg0: i32) -> (i32, i32) {
    %c0_i32 = arith.constant 0 : i32
    %c0_i32_0 = arith.constant 0 : i32
    %c0_i32_1 = arith.constant 0 : i32
    return %c0_i32, %c0_i32_0 : i32, i32
  }
  func.func @transform_5(%arg0: i32) -> (i32, i32) {
    %c0_i32 = arith.constant 0 : i32
    %c0_i32_0 = arith.constant 0 : i32
    %c0_i32_1 = arith.constant 0 : i32
    return %c0_i32, %c0_i32_0 : i32, i32
  }
  func.func @transform_6(%arg0: i32) -> (i32, i32) {
    %c0_i32 = arith.constant 0 : i32
    %c0_i32_0 = arith.constant 0 : i32
    %c0_i32_1 = arith.constant 0 : i32
    return %c0_i32, %c0_i32_0 : i32, i32
  }
  func.func @transform_7(%arg0: i32) -> (i32, i32) {
    %c0_i32 = arith.constant 0 : i32
    %c0_i32_0 = arith.constant 0 : i32
    %c0_i32_1 = arith.constant 0 : i32
    return %c0_i32, %c0_i32_0 : i32, i32
  }
  func.func @transform_8(%arg0: i32) -> (i32, i32) {
    %c0_i32 = arith.constant 0 : i32
    %c0_i32_0 = arith.constant 0 : i32
    %c0_i32_1 = arith.constant 0 : i32
    return %c0_i32, %c0_i32_0 : i32, i32
  }
  func.func @transform_9(%arg0: i32) -> (i32, i32) {
    %c0_i32 = arith.constant 0 : i32
    %c0_i32_0 = arith.constant 0 : i32
    %c0_i32_1 = arith.constant 0 : i32
    return %c0_i32, %c0_i32_0 : i32, i32
  }
  func.func @transform_10(%arg0: i32) -> (i32, i32) {
    %c0_i32 = arith.constant 0 : i32
    %c0_i32_0 = arith.constant 0 : i32
    %c0_i32_1 = arith.constant 0 : i32
    return %c0_i32, %c0_i32_0 : i32, i32
  }
  func.func @transform_11(%arg0: i32) -> (i32, i32) {
    %c0_i32 = arith.constant 0 : i32
    %c0_i32_0 = arith.constant 0 : i32
    %c0_i32_1 = arith.constant 0 : i32
    return %c0_i32, %c0_i32_0 : i32, i32
  }
  func.func @transform_12(%arg0: i32) -> (i32, i32) {
    %c0_i32 = arith.constant 0 : i32
    %c0_i32_0 = arith.constant 0 : i32
    %c0_i32_1 = arith.constant 0 : i32
    return %c0_i32, %c0_i32_0 : i32, i32
  }
  func.func @transform_13(%arg0: i32) -> (i32, i32) {
    %c0_i32 = arith.constant 0 : i32
    %c0_i32_0 = arith.constant 0 : i32
    return %arg0, %c0_i32 : i32, i32
  }
  func.func @transform_14(%arg0: i32) -> (i32, i32) {
    %c0_i32 = arith.constant 0 : i32
    %c0_i32_0 = arith.constant 0 : i32
    return %arg0, %c0_i32 : i32, i32
  }
}

</mosaic_0001>

<llo_original>
// kernel: encode_decode.1
$region0: #{encode_decode.1}
  #allocation0 [shape = 'u32[]', space=smem, size = 0x4, offset = 0x4, fixed_abs, tag = 'smem constant byte address 0x4 - core index']
  #allocation1 [shape = 'u32[72,128]{1,0:T(1,128)}', space=vmem, size = 0x9000, scoped, tag = 'internal scratch']
  %s0 = inlined_call_operand.vmem [shape: f32[32,16], index: 0, kind: input, shape index: {}]
  %s1 = inlined_call_operand.vmem [shape: f32[16,64], index: 1, kind: input, shape index: {}]
  %s2 = inlined_call_operand.vmem [shape: f32[1,64], index: 2, kind: input, shape index: {}]
  %s3 = inlined_call_operand.vmem [shape: f32[64,32], index: 3, kind: input, shape index: {}]
  %s4 = inlined_call_operand.vmem [shape: f32[1,32], index: 4, kind: input, shape index: {}]
  %s5 = inlined_call_operand.vmem [shape: f32[32,8], index: 5, kind: input, shape index: {}]
  %s6 = inlined_call_operand.vmem [shape: f32[1,8], index: 6, kind: input, shape index: {}]
  %s7 = inlined_call_operand.vmem [shape: f32[8,32], index: 7, kind: input, shape index: {}]
  %s8 = inlined_call_operand.vmem [shape: f32[1,32], index: 8, kind: input, shape index: {}]
  %s9 = inlined_call_operand.vmem [shape: f32[32,64], index: 9, kind: input, shape index: {}]
  %s10 = inlined_call_operand.vmem [shape: f32[1,64], index: 10, kind: input, shape index: {}]
  %s11 = inlined_call_operand.vmem [shape: f32[64,16], index: 11, kind: input, shape index: {}]
  %s12 = inlined_call_operand.vmem [shape: f32[1,16], index: 12, kind: input, shape index: {}]
  %s13 = inlined_call_operand.vmem [shape: f32[32,16], index: 13, kind: output, shape index: {0}]
  %s14 = inlined_call_operand.vmem [shape: f32[32,8], index: 14, kind: output, shape index: {1}]
  %15 = xla_tuple %s13, %s14
  %s16 = sld [smem:[#allocation0]]
  $region93: #{encode_decode.1} parent=0
    _
  %s18 = ssub.s32 1, %s16
  %s19 = scalar_select 0, %s18, %s16
  loop: start=0, step=1, limit=4
  $region2: #{encode_decode.1} parent=0 // loop_pre_header
    _
  $region3: #{encode_decode.1} parent=0 // loop_header
    %s21 = sphi 0, %s25
    %p22 = scmp.ge.s32.totalorder %s21, 4
    %s31 = sphi 0, %s33
    %s34 = sphi 0, %s31
    %s35 = sphi 0, %s34
    %s51 = sphi 0, %s35
    %s55 = sphi 0, %s55
    %s57 = sphi 0, %s55
    %s58 = sphi 0, %s57
    %s72 = sphi 0, %s58
    %s76 = sphi 0, %s76
    %s78 = sphi 0, %s76
    %s79 = sphi 0, %s78
    %s93 = sphi 0, %s79
    %s97 = sphi 0, %s97
    %s99 = sphi 0, %s97
    %s100 = sphi 0, %s99
    %s114 = sphi 0, %s100
    %s118 = sphi 0, %s118
    %s120 = sphi 0, %s118
    %s121 = sphi 0, %s120
    %s135 = sphi 0, %s121
    %s139 = sphi 0, %s139
    %s141 = sphi 0, %s139
    %s142 = sphi 0, %s141
    %s156 = sphi 0, %s142
    %s160 = sphi 0, %s160
    %s162 = sphi 0, %s160
    %s163 = sphi 0, %s162
    %s177 = sphi 0, %s163
    %s181 = sphi 0, %s181
    %s183 = sphi 0, %s181
    %s184 = sphi 0, %s183
    %s198 = sphi 0, %s184
    %s202 = sphi 0, %s202
    %s204 = sphi 0, %s202
    %s205 = sphi 0, %s204
    %s219 = sphi 0, %s205
    %s223 = sphi 0, %s223
    %s225 = sphi 0, %s223
    %s226 = sphi 0, %s225
    %s240 = sphi 0, %s226
    %s244 = sphi 0, %s244
    %s246 = sphi 0, %s244
    %s247 = sphi 0, %s246
    %s261 = sphi 0, %s247
    %s265 = sphi 0, %s265
    %s267 = sphi 0, %s265
    %s268 = sphi 0, %s267
    %s282 = sphi 0, %s268
    %s286 = sphi 0, %s286
    %s288 = sphi 0, %s286
    %s289 = sphi 0, %s288
    %s303 = sphi 0, %s289
    %s309 = sphi 0, %s311
    %s312 = sphi 0, %s309
    %s313 = sphi 0, %s312
    %s329 = sphi 0, %s313
    %s335 = sphi 0, %s337
    %s338 = sphi 0, %s335
    %s339 = sphi 0, %s338
    %s355 = sphi 0, %s339
  $region4: #{encode_decode.1} parent=0 // loop_header_branch
    %24 = sbr.rel (%p22) target = $region8
  $region5: #{encode_decode.1} parent=0 // loop_body
    %s26 = ssub.s32 %s21, 1
    %s27 = ssub.s32 %s21, 2
    %s28 = sadd.s32 %s21, 1
    %s29 = ssub.s32 %s21, %s28
    %p30 = scmp.eq.s32.totalorder %s29, 0
    %s32 = sadd.s32 %s31, 1
    %s33 = scalar_select %p30, %s31, %s32
    %p36 = pneg %p30
    %p37 = scmp.eq.s32.totalorder %s21, 1
    %p38 = por %p36, %p37
    %p39 = scmp.ne.s32.totalorder %s31, %s34
    %p40 = scmp.eq.s32.totalorder %s21, 0
    %p41 = por %p39, %p40
    %p42 = scmp.ne.s32.totalorder %s31, %s34
    %p43 = scmp.eq.s32.totalorder %s26, 1
    %p44 = por %p42, %p43
    %p45 = scmp.ne.s32.totalorder %s34, %s35
    %p46 = scmp.eq.s32.totalorder %s26, 0
    %p47 = por %p45, %p46
    %p48 = scmp.ne.s32.totalorder %s34, %s35
    %p49 = scmp.eq.s32.totalorder %s27, 1
    %p50 = por %p48, %p49
    %p52 = scmp.ne.s32.totalorder %s35, %s51
    %p53 = scmp.eq.s32.totalorder %s27, 0
    %p54 = por %p52, %p53
    %s56 = sadd.s32 %s55, 1
    %p59 = scmp.eq.s32.totalorder %s21, 1
    %p60 = scmp.ne.s32.totalorder %s55, %s57
    %p61 = scmp.eq.s32.totalorder %s21, 0
    %p62 = por %p60, %p61
    %p63 = scmp.ne.s32.totalorder %s55, %s57
    %p64 = scmp.eq.s32.totalorder %s26, 1
    %p65 = por %p63, %p64
    %p66 = scmp.ne.s32.totalorder %s57, %s58
    %p67 = scmp.eq.s32.totalorder %s26, 0
    %p68 = por %p66, %p67
    %p69 = scmp.ne.s32.totalorder %s57, %s58
    %p70 = scmp.eq.s32.totalorder %s27, 1
    %p71 = por %p69, %p70
    %p73 = scmp.ne.s32.totalorder %s58, %s72
    %p74 = scmp.eq.s32.totalorder %s27, 0
    %p75 = por %p73, %p74
    %s77 = sadd.s32 %s76, 1
    %p80 = scmp.eq.s32.totalorder %s21, 1
    %p81 = scmp.ne.s32.totalorder %s76, %s78
    %p82 = scmp.eq.s32.totalorder %s21, 0
    %p83 = por %p81, %p82
    %p84 = scmp.ne.s32.totalorder %s76, %s78
    %p85 = scmp.eq.s32.totalorder %s26, 1
    %p86 = por %p84, %p85
    %p87 = scmp.ne.s32.totalorder %s78, %s79
    %p88 = scmp.eq.s32.totalorder %s26, 0
    %p89 = por %p87, %p88
    %p90 = scmp.ne.s32.totalorder %s78, %s79
    %p91 = scmp.eq.s32.totalorder %s27, 1
    %p92 = por %p90, %p91
    %p94 = scmp.ne.s32.totalorder %s79, %s93
    %p95 = scmp.eq.s32.totalorder %s27, 0
    %p96 = por %p94, %p95
    %s98 = sadd.s32 %s97, 1
    %p101 = scmp.eq.s32.totalorder %s21, 1
    %p102 = scmp.ne.s32.totalorder %s97, %s99
    %p103 = scmp.eq.s32.totalorder %s21, 0
    %p104 = por %p102, %p103
    %p105 = scmp.ne.s32.totalorder %s97, %s99
    %p106 = scmp.eq.s32.totalorder %s26, 1
    %p107 = por %p105, %p106
    %p108 = scmp.ne.s32.totalorder %s99, %s100
    %p109 = scmp.eq.s32.totalorder %s26, 0
    %p110 = por %p108, %p109
    %p111 = scmp.ne.s32.totalorder %s99, %s100
    %p112 = scmp.eq.s32.totalorder %s27, 1
    %p113 = por %p111, %p112
    %p115 = scmp.ne.s32.totalorder %s100, %s114
    %p116 = scmp.eq.s32.totalorder %s27, 0
    %p117 = por %p115, %p116
    %s119 = sadd.s32 %s118, 1
    %p122 = scmp.eq.s32.totalorder %s21, 1
    %p123 = scmp.ne.s32.totalorder %s118, %s120
    %p124 = scmp.eq.s32.totalorder %s21, 0
    %p125 = por %p123, %p124
    %p126 = scmp.ne.s32.totalorder %s118, %s120
    %p127 = scmp.eq.s32.totalorder %s26, 1
    %p128 = por %p126, %p127
    %p129 = scmp.ne.s32.totalorder %s120, %s121
    %p130 = scmp.eq.s32.totalorder %s26, 0
    %p131 = por %p129, %p130
    %p132 = scmp.ne.s32.totalorder %s120, %s121
    %p133 = scmp.eq.s32.totalorder %s27, 1
    %p134 = por %p132, %p133
    %p136 = scmp.ne.s32.totalorder %s121, %s135
    %p137 = scmp.eq.s32.totalorder %s27, 0
    %p138 = por %p136, %p137
    %s140 = sadd.s32 %s139, 1
    %p143 = scmp.eq.s32.totalorder %s21, 1
    %p144 = scmp.ne.s32.totalorder %s139, %s141
    %p145 = scmp.eq.s32.totalorder %s21, 0
    %p146 = por %p144, %p145
    %p147 = scmp.ne.s32.totalorder %s139, %s141
    %p148 = scmp.eq.s32.totalorder %s26, 1
    %p149 = por %p147, %p148
    %p150 = scmp.ne.s32.totalorder %s141, %s142
    %p151 = scmp.eq.s32.totalorder %s26, 0
    %p152 = por %p150, %p151
    %p153 = scmp.ne.s32.totalorder %s141, %s142
    %p154 = scmp.eq.s32.totalorder %s27, 1
    %p155 = por %p153, %p154
    %p157 = scmp.ne.s32.totalorder %s142, %s156
    %p158 = scmp.eq.s32.totalorder %s27, 0
    %p159 = por %p157, %p158
    %s161 = sadd.s32 %s160, 1
    %p164 = scmp.eq.s32.totalorder %s21, 1
    %p165 = scmp.ne.s32.totalorder %s160, %s162
    %p166 = scmp.eq.s32.totalorder %s21, 0
    %p167 = por %p165, %p166
    %p168 = scmp.ne.s32.totalorder %s160, %s162
    %p169 = scmp.eq.s32.totalorder %s26, 1
    %p170 = por %p168, %p169
    %p171 = scmp.ne.s32.totalorder %s162, %s163
    %p172 = scmp.eq.s32.totalorder %s26, 0
    %p173 = por %p171, %p172
    %p174 = scmp.ne.s32.totalorder %s162, %s163
    %p175 = scmp.eq.s32.totalorder %s27, 1
    %p176 = por %p174, %p175
    %p178 = scmp.ne.s32.totalorder %s163, %s177
    %p179 = scmp.eq.s32.totalorder %s27, 0
    %p180 = por %p178, %p179
    %s182 = sadd.s32 %s181, 1
    %p185 = scmp.eq.s32.totalorder %s21, 1
    %p186 = scmp.ne.s32.totalorder %s181, %s183
    %p187 = scmp.eq.s32.totalorder %s21, 0
    %p188 = por %p186, %p187
    %p189 = scmp.ne.s32.totalorder %s181, %s183
    %p190 = scmp.eq.s32.totalorder %s26, 1
    %p191 = por %p189, %p190
    %p192 = scmp.ne.s32.totalorder %s183, %s184
    %p193 = scmp.eq.s32.totalorder %s26, 0
    %p194 = por %p192, %p193
    %p195 = scmp.ne.s32.totalorder %s183, %s184
    %p196 = scmp.eq.s32.totalorder %s27, 1
    %p197 = por %p195, %p196
    %p199 = scmp.ne.s32.totalorder %s184, %s198
    %p200 = scmp.eq.s32.totalorder %s27, 0
    %p201 = por %p199, %p200
    %s203 = sadd.s32 %s202, 1
    %p206 = scmp.eq.s32.totalorder %s21, 1
    %p207 = scmp.ne.s32.totalorder %s202, %s204
    %p208 = scmp.eq.s32.totalorder %s21, 0
    %p209 = por %p207, %p208
    %p210 = scmp.ne.s32.totalorder %s202, %s204
    %p211 = scmp.eq.s32.totalorder %s26, 1
    %p212 = por %p210, %p211
    %p213 = scmp.ne.s32.totalorder %s204, %s205
    %p214 = scmp.eq.s32.totalorder %s26, 0
    %p215 = por %p213, %p214
    %p216 = scmp.ne.s32.totalorder %s204, %s205
    %p217 = scmp.eq.s32.totalorder %s27, 1
    %p218 = por %p216, %p217
    %p220 = scmp.ne.s32.totalorder %s205, %s219
    %p221 = scmp.eq.s32.totalorder %s27, 0
    %p222 = por %p220, %p221
    %s224 = sadd.s32 %s223, 1
    %p227 = scmp.eq.s32.totalorder %s21, 1
    %p228 = scmp.ne.s32.totalorder %s223, %s225
    %p229 = scmp.eq.s32.totalorder %s21, 0
    %p230 = por %p228, %p229
    %p231 = scmp.ne.s32.totalorder %s223, %s225
    %p232 = scmp.eq.s32.totalorder %s26, 1
    %p233 = por %p231, %p232
    %p234 = scmp.ne.s32.totalorder %s225, %s226
    %p235 = scmp.eq.s32.totalorder %s26, 0
    %p236 = por %p234, %p235
    %p237 = scmp.ne.s32.totalorder %s225, %s226
    %p238 = scmp.eq.s32.totalorder %s27, 1
    %p239 = por %p237, %p238
    %p241 = scmp.ne.s32.totalorder %s226, %s240
    %p242 = scmp.eq.s32.totalorder %s27, 0
    %p243 = por %p241, %p242
    %s245 = sadd.s32 %s244, 1
    %p248 = scmp.eq.s32.totalorder %s21, 1
    %p249 = scmp.ne.s32.totalorder %s244, %s246
    %p250 = scmp.eq.s32.totalorder %s21, 0
    %p251 = por %p249, %p250
    %p252 = scmp.ne.s32.totalorder %s244, %s246
    %p253 = scmp.eq.s32.totalorder %s26, 1
    %p254 = por %p252, %p253
    %p255 = scmp.ne.s32.totalorder %s246, %s247
    %p256 = scmp.eq.s32.totalorder %s26, 0
    %p257 = por %p255, %p256
    %p258 = scmp.ne.s32.totalorder %s246, %s247
    %p259 = scmp.eq.s32.totalorder %s27, 1
    %p260 = por %p258, %p259
    %p262 = scmp.ne.s32.totalorder %s247, %s261
    %p263 = scmp.eq.s32.totalorder %s27, 0
    %p264 = por %p262, %p263
    %s266 = sadd.s32 %s265, 1
    %p269 = scmp.eq.s32.totalorder %s21, 1
    %p270 = scmp.ne.s32.totalorder %s265, %s267
    %p271 = scmp.eq.s32.totalorder %s21, 0
    %p272 = por %p270, %p271
    %p273 = scmp.ne.s32.totalorder %s265, %s267
    %p274 = scmp.eq.s32.totalorder %s26, 1
    %p275 = por %p273, %p274
    %p276 = scmp.ne.s32.totalorder %s267, %s268
    %p277 = scmp.eq.s32.totalorder %s26, 0
    %p278 = por %p276, %p277
    %p279 = scmp.ne.s32.totalorder %s267, %s268
    %p280 = scmp.eq.s32.totalorder %s27, 1
    %p281 = por %p279, %p280
    %p283 = scmp.ne.s32.totalorder %s268, %s282
    %p284 = scmp.eq.s32.totalorder %s27, 0
    %p285 = por %p283, %p284
    %s287 = sadd.s32 %s286, 1
    %p290 = scmp.eq.s32.totalorder %s21, 1
    %p291 = scmp.ne.s32.totalorder %s286, %s288
    %p292 = scmp.eq.s32.totalorder %s21, 0
    %p293 = por %p291, %p292
    %p294 = scmp.ne.s32.totalorder %s286, %s288
    %p295 = scmp.eq.s32.totalorder %s26, 1
    %p296 = por %p294, %p295
    %p297 = scmp.ne.s32.totalorder %s288, %s289
    %p298 = scmp.eq.s32.totalorder %s26, 0
    %p299 = por %p297, %p298
    %p300 = scmp.ne.s32.totalorder %s288, %s289
    %p301 = scmp.eq.s32.totalorder %s27, 1
    %p302 = por %p300, %p301
    %p304 = scmp.ne.s32.totalorder %s289, %s303
    %p305 = scmp.eq.s32.totalorder %s27, 0
    %p306 = por %p304, %p305
    %s307 = ssub.s32 %s21, %s28
    %p308 = scmp.eq.s32.totalorder %s307, 0
    %s310 = sadd.s32 %s309, 1
    %s311 = scalar_select %p308, %s309, %s310
    %p314 = pneg %p308
    %p315 = scmp.eq.s32.totalorder %s21, 1
    %p316 = por %p314, %p315
    %p317 = scmp.ne.s32.totalorder %s309, %s312
    %p318 = scmp.eq.s32.totalorder %s21, 0
    %p319 = por %p317, %p318
    %p320 = scmp.ne.s32.totalorder %s309, %s312
    %p321 = scmp.eq.s32.totalorder %s26, 1
    %p322 = por %p320, %p321
    %p323 = scmp.ne.s32.totalorder %s312, %s313
    %p324 = scmp.eq.s32.totalorder %s26, 0
    %p325 = por %p323, %p324
    %p326 = scmp.ne.s32.totalorder %s312, %s313
    %p327 = scmp.eq.s32.totalorder %s27, 1
    %p328 = por %p326, %p327
    %p330 = scmp.ne.s32.totalorder %s313, %s329
    %p331 = scmp.eq.s32.totalorder %s27, 0
    %p332 = por %p330, %p331
    %s333 = ssub.s32 %s21, %s28
    %p334 = scmp.eq.s32.totalorder %s333, 0
    %s336 = sadd.s32 %s335, 1
    %s337 = scalar_select %p334, %s335, %s336
    %p340 = pneg %p334
    %p341 = scmp.eq.s32.totalorder %s21, 1
    %p342 = por %p340, %p341
    %p343 = scmp.ne.s32.totalorder %s335, %s338
    %p344 = scmp.eq.s32.totalorder %s21, 0
    %p345 = por %p343, %p344
    %p346 = scmp.ne.s32.totalorder %s335, %s338
    %p347 = scmp.eq.s32.totalorder %s26, 1
    %p348 = por %p346, %p347
    %p349 = scmp.ne.s32.totalorder %s338, %s339
    %p350 = scmp.eq.s32.totalorder %s26, 0
    %p351 = por %p349, %p350
    %p352 = scmp.ne.s32.totalorder %s338, %s339
    %p353 = scmp.eq.s32.totalorder %s27, 1
    %p354 = por %p352, %p353
    %p356 = scmp.ne.s32.totalorder %s339, %s355
    %p357 = scmp.eq.s32.totalorder %s27, 0
    %p358 = por %p356, %p357
    %p359 = scmp.le.s32.totalorder 1, %s21
    %p360 = scmp.lt.s32.totalorder %s21, 3
    %p361 = pnand %p359, %p360
    %p362 = pneg %p361
    // Predicated region
    $region9: #{encode_decode.1} parent=5 // pred_check
      _
    $region10: #{encode_decode.1} parent=5 // pred_check_branch
      %364 = sbr.rel (%p361) target = $region12
    $region11: #{encode_decode.1} parent=5 // pred_region
      %s365 = ssub.s32 %s21, 1
      // Predicated region
      $region13: #{encode_decode.1} parent=11 // pred_check
        %p366 = pneg %p68
      $region14: #{encode_decode.1} parent=11 // pred_check_branch
        %368 = sbr.rel (%p366) target = $region16
      $region15: #{encode_decode.1} parent=11 // pred_region
        _
      $region16: #{encode_decode.1} parent=11 // pred_fallthru
        _
      // Predicated region
      $region17: #{encode_decode.1} parent=11 // pred_check
        %p369 = pneg %p89
      $region18: #{encode_decode.1} parent=11 // pred_check_branch
        %371 = sbr.rel (%p369) target = $region20
      $region19: #{encode_decode.1} parent=11 // pred_region
        _
      $region20: #{encode_decode.1} parent=11 // pred_fallthru
        _
      // Predicated region
      $region21: #{encode_decode.1} parent=11 // pred_check
        %p372 = pneg %p110
      $region22: #{encode_decode.1} parent=11 // pred_check_branch
        %374 = sbr.rel (%p372) target = $region24
      $region23: #{encode_decode.1} parent=11 // pred_region
        _
      $region24: #{encode_decode.1} parent=11 // pred_fallthru
        _
      // Predicated region
      $region25: #{encode_decode.1} parent=11 // pred_check
        %p375 = pneg %p131
      $region26: #{encode_decode.1} parent=11 // pred_check_branch
        %377 = sbr.rel (%p375) target = $region28
      $region27: #{encode_decode.1} parent=11 // pred_region
        _
      $region28: #{encode_decode.1} parent=11 // pred_fallthru
        _
      // Predicated region
      $region29: #{encode_decode.1} parent=11 // pred_check
        %p378 = pneg %p152
      $region30: #{encode_decode.1} parent=11 // pred_check_branch
        %380 = sbr.rel (%p378) target = $region32
      $region31: #{encode_decode.1} parent=11 // pred_region
        _
      $region32: #{encode_decode.1} parent=11 // pred_fallthru
        _
      // Predicated region
      $region33: #{encode_decode.1} parent=11 // pred_check
        %p381 = pneg %p173
      $region34: #{encode_decode.1} parent=11 // pred_check_branch
        %383 = sbr.rel (%p381) target = $region36
      $region35: #{encode_decode.1} parent=11 // pred_region
        _
      $region36: #{encode_decode.1} parent=11 // pred_fallthru
        _
      // Predicated region
      $region37: #{encode_decode.1} parent=11 // pred_check
        %p384 = pneg %p194
      $region38: #{encode_decode.1} parent=11 // pred_check_branch
        %386 = sbr.rel (%p384) target = $region40
      $region39: #{encode_decode.1} parent=11 // pred_region
        _
      $region40: #{encode_decode.1} parent=11 // pred_fallthru
        _
      // Predicated region
      $region41: #{encode_decode.1} parent=11 // pred_check
        %p387 = pneg %p215
      $region42: #{encode_decode.1} parent=11 // pred_check_branch
        %389 = sbr.rel (%p387) target = $region44
      $region43: #{encode_decode.1} parent=11 // pred_region
        _
      $region44: #{encode_decode.1} parent=11 // pred_fallthru
        _
      // Predicated region
      $region45: #{encode_decode.1} parent=11 // pred_check
        %p390 = pneg %p236
      $region46: #{encode_decode.1} parent=11 // pred_check_branch
        %392 = sbr.rel (%p390) target = $region48
      $region47: #{encode_decode.1} parent=11 // pred_region
        _
      $region48: #{encode_decode.1} parent=11 // pred_fallthru
        _
      // Predicated region
      $region49: #{encode_decode.1} parent=11 // pred_check
        %p393 = pneg %p257
      $region50: #{encode_decode.1} parent=11 // pred_check_branch
        %395 = sbr.rel (%p393) target = $region52
      $region51: #{encode_decode.1} parent=11 // pred_region
        _
      $region52: #{encode_decode.1} parent=11 // pred_fallthru
        _
      // Predicated region
      $region53: #{encode_decode.1} parent=11 // pred_check
        %p396 = pneg %p278
      $region54: #{encode_decode.1} parent=11 // pred_check_branch
        %398 = sbr.rel (%p396) target = $region56
      $region55: #{encode_decode.1} parent=11 // pred_region
        _
      $region56: #{encode_decode.1} parent=11 // pred_fallthru
        _
      // Predicated region
      $region57: #{encode_decode.1} parent=11 // pred_check
        %p399 = pneg %p299
      $region58: #{encode_decode.1} parent=11 // pred_check_branch
        %401 = sbr.rel (%p399) target = $region60
      $region59: #{encode_decode.1} parent=11 // pred_region
        _
      $region60: #{encode_decode.1} parent=11 // pred_fallthru
        _
    $region12: #{encode_decode.1} parent=5 // pred_fallthru
      _
    %p402 = scmp.lt.s32.totalorder %s21, 2
    // Predicated region
    $region61: #{encode_decode.1} parent=5 // pred_check
      %p403 = pneg %p402
    $region62: #{encode_decode.1} parent=5 // pred_check_branch
      %405 = sbr.rel (%p403) target = $region64
    $region63: #{encode_decode.1} parent=5 // pred_region
      // Predicated region
      $region65: #{encode_decode.1} parent=63 // pred_check
        %p406 = pneg %p41
      $region66: #{encode_decode.1} parent=63 // pred_check_branch
        %408 = sbr.rel (%p406) target = $region68
      $region67: #{encode_decode.1} parent=63 // pred_region
        %s409 = smul.u32 2, %s21
        %p410 = scmp.lt.s32.totalorder %s409, 3
        %s411 = scalar_select %p410, %s409, 3
        %s412 = smul.addr %s411, 8
        %s413 = scalar_lea.vmem %s0, %s412
        %s414 = smul.u32 2, %s21
      $region68: #{encode_decode.1} parent=63 // pred_fallthru
        _
    $region64: #{encode_decode.1} parent=5 // pred_fallthru
      _
    %p415 = scmp.le.s32.totalorder 1, %s21
    %p416 = scmp.lt.s32.totalorder %s21, 3
    %p417 = pnand %p415, %p416
    %p418 = pneg %p417
    // Predicated region
    $region69: #{encode_decode.1} parent=5 // pred_check
      _
    $region70: #{encode_decode.1} parent=5 // pred_check_branch
      %420 = sbr.rel (%p417) target = $region72
    $region71: #{encode_decode.1} parent=5 // pred_region
      %s421 = ssub.s32 %s21, 1
      %s422 = smul.u32 2, %s26
      %p423 = scmp.lt.s32.totalorder %s422, 3
      %s424 = scalar_select %p423, %s422, 3
      %s425 = smul.addr %s424, 8
      %s426 = scalar_lea.vmem %s0, %s425
      %p427 = pneg %p47
      %p428 = pneg %p44
      %p429 = pneg %p68
      %p430 = pneg %p65
      %p431 = pneg %p89
      %p432 = pneg %p86
      %p433 = pneg %p110
      %p434 = pneg %p107
      %p435 = pneg %p131
      %p436 = pneg %p128
      %p437 = pneg %p152
      %p438 = pneg %p149
      %p439 = pneg %p173
      %p440 = pneg %p170
      %p441 = pneg %p194
      %p442 = pneg %p191
      %p443 = pneg %p215
      %p444 = pneg %p212
      %p445 = pneg %p236
      %p446 = pneg %p233
      %p447 = pneg %p257
      %p448 = pneg %p254
      %p449 = pneg %p278
      %p450 = pneg %p275
      %p451 = pneg %p299
      %p452 = pneg %p296
      %p453 = pneg %p325
      %p454 = pneg %p322
      %s455 = smul.u32 2, %s26
      %p456 = scmp.lt.s32.totalorder %s455, 3
      %s457 = scalar_select %p456, %s455, 3
      %s458 = smul.addr %s457, 8
      %s459 = scalar_lea.vmem %s13, %s458
      %p460 = pneg %p351
      %p461 = pneg %p348
      %s462 = smul.u32 2, %s26
      %p463 = scmp.lt.s32.totalorder %s462, 3
      %s464 = scalar_select %p463, %s462, 3
      %s465 = smul.addr %s464, 8
      %s466 = scalar_lea.vmem %s14, %s465
      %s467 = smul.u32 2, %s26
      %p468 = scmp.lt.s32.totalorder %s467, 3
      %s469 = scalar_select %p468, %s467, 3
      %s470 = smul.addr %s469, 8
      %s471 = scalar_lea.vmem %s0, %s470
      %s472 = smul.u32 2, %s26
      %s473 = smul.u32 2, %s26
      %p474 = scmp.lt.s32.totalorder %s473, 3
      %s475 = scalar_select %p474, %s473, 3
      %s476 = smul.addr %s475, 8
      %s477 = scalar_lea.vmem %s13, %s476
      %s478 = smul.u32 2, %s26
      %s479 = smul.u32 2, %s26
      %p480 = scmp.lt.s32.totalorder %s479, 3
      %s481 = scalar_select %p480, %s479, 3
      %s482 = smul.addr %s481, 8
      %s483 = scalar_lea.vmem %s14, %s482
      %s484 = smul.u32 2, %s26
      %v485 = vld [vmem:[%s471] sm:$0xff]
      %v486 = vld [vmem:[%s471 + $0x8] sm:$0xff]
      %v487 = vld [vmem:[%s2] sm:$0x1]
      %v488 = vld [vmem:[%s4] sm:$0x1]
      %v489 = vld [vmem:[%s6] sm:$0x1]
      %v490 = vld [vmem:[%s8] sm:$0x1]
      %v491 = vld [vmem:[%s10] sm:$0x1]
      %v492 = vld [vmem:[%s12] sm:$0x1]
      %v493 = vld [vmem:[%s1] sm:$0xff]
      %v494 = vld [vmem:[%s1 + $0x8] sm:$0xff]
      %v496 = vperm.slane %v487, 0
      %vm498 = vcmask 130048
      %v500 = vsel %vm498, %v485, 0
      %v503 = vsel %vm498, %v486, 0
      %505 = vmatpush.msra.mxu0 0.0
      %506 = vmatpush.msra.mxu0 0.0
      %507 = vmatpush.msra.mxu0 0.0
      %508 = vmatpush.msra.mxu0 0.0
      %509 = vmatpush.msra.mxu0 0.0
      %510 = vmatpush.msra.mxu0 0.0
      %511 = vmatpush.msra.mxu0 0.0
      %512 = vmatpush.msra.mxu0 0.0
      %513 = vmatpush.msra.mxu0 0.0
      %514 = vmatpush.msra.mxu0 0.0
      %515 = vmatpush.msra.mxu0 0.0
      %516 = vmatpush.msra.mxu0 0.0
      %517 = vmatpush.msra.mxu0 0.0
      %518 = vmatpush.msra.mxu0 0.0
      %519 = vmatpush.msra.mxu0 %v494
      %520 = vmatpush.msra.mxu0 %v493
      %521 = vmatmul.f32.gmra.mxu0 %v500
      %v522 = vpop.f32.mrf.mxu0
      %v523 = vadd.f32 %v496, %v522
      %524 = vmatmul.f32.gmra.mxu0 %v503
      %v525 = vpop.f32.mrf.mxu0
      %v526 = vadd.f32 %v496, %v525
      %527 = vdwg.mxu0
      %v528 = vmax.f32 %v523, 0.0
      %v529 = vmax.f32 %v526, 0.0
      %v530 = vld [vmem:[%s3] sm:$0xff]
      %v531 = vld [vmem:[%s3 + $0x8] sm:$0xff]
      %v532 = vld [vmem:[%s3 + $0x10] sm:$0xff]
      %v533 = vld [vmem:[%s3 + $0x18] sm:$0xff]
      %v534 = vld [vmem:[%s3 + $0x20] sm:$0xff]
      %v535 = vld [vmem:[%s3 + $0x28] sm:$0xff]
      %v536 = vld [vmem:[%s3 + $0x30] sm:$0xff]
      %v537 = vld [vmem:[%s3 + $0x38] sm:$0xff]
      %v539 = vperm.slane %v488, 0
      %vm541 = vcmask 523264
      %v543 = vsel %vm541, %v528, 0
      %v546 = vsel %vm541, %v529, 0
      %548 = vmatpush.msra.mxu0 0.0
      %549 = vmatpush.msra.mxu0 0.0
      %550 = vmatpush.msra.mxu0 0.0
      %551 = vmatpush.msra.mxu0 0.0
      %552 = vmatpush.msra.mxu0 0.0
      %553 = vmatpush.msra.mxu0 0.0
      %554 = vmatpush.msra.mxu0 0.0
      %555 = vmatpush.msra.mxu0 0.0
      %556 = vmatpush.msra.mxu0 %v537
      %557 = vmatpush.msra.mxu0 %v536
      %558 = vmatpush.msra.mxu0 %v535
      %559 = vmatpush.msra.mxu0 %v534
      %560 = vmatpush.msra.mxu0 %v533
      %561 = vmatpush.msra.mxu0 %v532
      %562 = vmatpush.msra.mxu0 %v531
      %563 = vmatpush.msra.mxu0 %v530
      %564 = vmatmul.f32.gmra.mxu0 %v543
      %v565 = vpop.f32.mrf.mxu0
      %v566 = vadd.f32 %v539, %v565
      %567 = vmatmul.f32.gmra.mxu0 %v546
      %v568 = vpop.f32.mrf.mxu0
      %v569 = vadd.f32 %v539, %v568
      %570 = vdwg.mxu0
      %v571 = vmax.f32 %v566, 0.0
      %v572 = vmax.f32 %v569, 0.0
      %v573 = vld [vmem:[%s5] sm:$0xff]
      %v574 = vld [vmem:[%s5 + $0x8] sm:$0xff]
      %v575 = vld [vmem:[%s5 + $0x10] sm:$0xff]
      %v576 = vld [vmem:[%s5 + $0x18] sm:$0xff]
      %v578 = vperm.slane %v489, 0
      %vm580 = vcmask 261120
      %v582 = vsel %vm580, %v571, 0
      %v585 = vsel %vm580, %v572, 0
      %587 = vmatpush.msra.mxu0 0.0
      %588 = vmatpush.msra.mxu0 0.0
      %589 = vmatpush.msra.mxu0 0.0
      %590 = vmatpush.msra.mxu0 0.0
      %591 = vmatpush.msra.mxu0 0.0
      %592 = vmatpush.msra.mxu0 0.0
      %593 = vmatpush.msra.mxu0 0.0
      %594 = vmatpush.msra.mxu0 0.0
      %595 = vmatpush.msra.mxu0 0.0
      %596 = vmatpush.msra.mxu0 0.0
      %597 = vmatpush.msra.mxu0 0.0
      %598 = vmatpush.msra.mxu0 0.0
      %599 = vmatpush.msra.mxu0 %v576
      %600 = vmatpush.msra.mxu0 %v575
      %601 = vmatpush.msra.mxu0 %v574
      %602 = vmatpush.msra.mxu0 %v573
      %603 = vmatmul.f32.gmra.mxu0 %v582
      %v604 = vpop.f32.mrf.mxu0
      %v605 = vadd.f32 %v578, %v604
      %606 = vmatmul.f32.gmra.mxu0 %v585
      %v607 = vpop.f32.mrf.mxu0
      %v608 = vadd.f32 %v578, %v607
      %609 = vdwg.mxu0
      %v610 = vld [vmem:[%s7] sm:$0xff]
      %v612 = vperm.slane %v490, 0
      %vm614 = vcmask 64512
      %v616 = vsel %vm614, %v605, 0
      %v619 = vsel %vm614, %v608, 0
      %621 = vmatpush.msra.mxu0 0.0
      %622 = vmatpush.msra.mxu0 0.0
      %623 = vmatpush.msra.mxu0 0.0
      %624 = vmatpush.msra.mxu0 0.0
      %625 = vmatpush.msra.mxu0 0.0
      %626 = vmatpush.msra.mxu0 0.0
      %627 = vmatpush.msra.mxu0 0.0
      %628 = vmatpush.msra.mxu0 0.0
      %629 = vmatpush.msra.mxu0 0.0
      %630 = vmatpush.msra.mxu0 0.0
      %631 = vmatpush.msra.mxu0 0.0
      %632 = vmatpush.msra.mxu0 0.0
      %633 = vmatpush.msra.mxu0 0.0
      %634 = vmatpush.msra.mxu0 0.0
      %635 = vmatpush.msra.mxu0 0.0
      %636 = vmatpush.msra.mxu0 %v610
      %637 = vmatmul.f32.gmra.mxu0 %v616
      %v638 = vpop.f32.mrf.mxu0
      %v639 = vadd.f32 %v612, %v638
      %640 = vmatmul.f32.gmra.mxu0 %v619
      %v641 = vpop.f32.mrf.mxu0
      %v642 = vadd.f32 %v612, %v641
      %643 = vdwg.mxu0
      %v644 = vmax.f32 %v639, 0.0
      %v645 = vmax.f32 %v642, 0.0
      %v646 = vld [vmem:[%s9] sm:$0xff]
      %v647 = vld [vmem:[%s9 + $0x8] sm:$0xff]
      %v648 = vld [vmem:[%s9 + $0x10] sm:$0xff]
      %v649 = vld [vmem:[%s9 + $0x18] sm:$0xff]
      %v651 = vperm.slane %v491, 0
      %v654 = vsel %vm580, %v644, 0
      %v657 = vsel %vm580, %v645, 0
      %659 = vmatpush.msra.mxu0 0.0
      %660 = vmatpush.msra.mxu0 0.0
      %661 = vmatpush.msra.mxu0 0.0
      %662 = vmatpush.msra.mxu0 0.0
      %663 = vmatpush.msra.mxu0 0.0
      %664 = vmatpush.msra.mxu0 0.0
      %665 = vmatpush.msra.mxu0 0.0
      %666 = vmatpush.msra.mxu0 0.0
      %667 = vmatpush.msra.mxu0 0.0
      %668 = vmatpush.msra.mxu0 0.0
      %669 = vmatpush.msra.mxu0 0.0
      %670 = vmatpush.msra.mxu0 0.0
      %671 = vmatpush.msra.mxu0 %v649
      %672 = vmatpush.msra.mxu0 %v648
      %673 = vmatpush.msra.mxu0 %v647
      %674 = vmatpush.msra.mxu0 %v646
      %675 = vmatmul.f32.gmra.mxu0 %v654
      %v676 = vpop.f32.mrf.mxu0
      %v677 = vadd.f32 %v651, %v676
      %678 = vmatmul.f32.gmra.mxu0 %v657
      %v679 = vpop.f32.mrf.mxu0
      %v680 = vadd.f32 %v651, %v679
      %681 = vdwg.mxu0
      %v682 = vmax.f32 %v677, 0.0
      %v683 = vmax.f32 %v680, 0.0
      %v684 = vld [vmem:[%s11] sm:$0xff]
      %v685 = vld [vmem:[%s11 + $0x8] sm:$0xff]
      %v686 = vld [vmem:[%s11 + $0x10] sm:$0xff]
      %v687 = vld [vmem:[%s11 + $0x18] sm:$0xff]
      %v688 = vld [vmem:[%s11 + $0x20] sm:$0xff]
      %v689 = vld [vmem:[%s11 + $0x28] sm:$0xff]
      %v690 = vld [vmem:[%s11 + $0x30] sm:$0xff]
      %v691 = vld [vmem:[%s11 + $0x38] sm:$0xff]
      %v693 = vperm.slane %v492, 0
      %v696 = vsel %vm541, %v682, 0
      %v699 = vsel %vm541, %v683, 0
      %701 = vmatpush.msra.mxu0 0.0
      %702 = vmatpush.msra.mxu0 0.0
      %703 = vmatpush.msra.mxu0 0.0
      %704 = vmatpush.msra.mxu0 0.0
      %705 = vmatpush.msra.mxu0 0.0
      %706 = vmatpush.msra.mxu0 0.0
      %707 = vmatpush.msra.mxu0 0.0
      %708 = vmatpush.msra.mxu0 0.0
      %709 = vmatpush.msra.mxu0 %v691
      %710 = vmatpush.msra.mxu0 %v690
      %711 = vmatpush.msra.mxu0 %v689
      %712 = vmatpush.msra.mxu0 %v688
      %713 = vmatpush.msra.mxu0 %v687
      %714 = vmatpush.msra.mxu0 %v686
      %715 = vmatpush.msra.mxu0 %v685
      %716 = vmatpush.msra.mxu0 %v684
      %717 = vmatmul.f32.gmra.mxu0 %v696
      %v718 = vpop.f32.mrf.mxu0
      %v719 = vadd.f32 %v693, %v718
      %720 = vmatmul.f32.gmra.mxu0 %v699
      %v721 = vpop.f32.mrf.mxu0
      %v722 = vadd.f32 %v693, %v721
      %723 = vdwg.mxu0
      %724 = vst.msk [vmem:[%s477] sm:$0xff] %vm498, %v719
      %725 = vst.msk [vmem:[%s477 + $0x8] sm:$0xff] %vm498, %v722
      %726 = vst.msk [vmem:[%s483] sm:$0xff] %vm614, %v605
      %727 = vst.msk [vmem:[%s483 + $0x8] sm:$0xff] %vm614, %v608
      %s728 = smul.u32 2, %s26
      %p729 = scmp.lt.s32.totalorder %s728, 3
      %s730 = scalar_select %p729, %s728, 3
      %s731 = smul.addr %s730, 8
      %s732 = scalar_lea.vmem %s13, %s731
      %s733 = smul.u32 2, %s26
      %p734 = scmp.lt.s32.totalorder %s733, 3
      %s735 = scalar_select %p734, %s733, 3
      %s736 = smul.addr %s735, 8
      %s737 = scalar_lea.vmem %s14, %s736
      // Predicated region
      $region73: #{encode_decode.1} parent=71 // pred_check
        %p738 = pneg %p322
      $region74: #{encode_decode.1} parent=71 // pred_check_branch
        %740 = sbr.rel (%p738) target = $region76
      $region75: #{encode_decode.1} parent=71 // pred_region
        %s741 = smul.u32 2, %s26
      $region76: #{encode_decode.1} parent=71 // pred_fallthru
        _
      // Predicated region
      $region77: #{encode_decode.1} parent=71 // pred_check
        %p742 = pneg %p348
      $region78: #{encode_decode.1} parent=71 // pred_check_branch
        %744 = sbr.rel (%p742) target = $region80
      $region79: #{encode_decode.1} parent=71 // pred_region
        %s745 = smul.u32 2, %s26
      $region80: #{encode_decode.1} parent=71 // pred_fallthru
        _
    $region72: #{encode_decode.1} parent=5 // pred_fallthru
      _
    %p746 = scmp.le.s32.totalorder 2, %s21
    // Predicated region
    $region81: #{encode_decode.1} parent=5 // pred_check
      %p747 = pneg %p746
    $region82: #{encode_decode.1} parent=5 // pred_check_branch
      %749 = sbr.rel (%p747) target = $region84
    $region83: #{encode_decode.1} parent=5 // pred_region
      %s750 = ssub.s32 %s21, 2
      // Predicated region
      $region85: #{encode_decode.1} parent=83 // pred_check
        %p751 = pneg %p328
      $region86: #{encode_decode.1} parent=83 // pred_check_branch
        %753 = sbr.rel (%p751) target = $region88
      $region87: #{encode_decode.1} parent=83 // pred_region
        %s754 = smul.u32 2, %s27
        %p755 = scmp.lt.s32.totalorder %s754, 3
        %s756 = scalar_select %p755, %s754, 3
        %s757 = smul.addr %s756, 8
        %s758 = scalar_lea.vmem %s13, %s757
      $region88: #{encode_decode.1} parent=83 // pred_fallthru
        _
      // Predicated region
      $region89: #{encode_decode.1} parent=83 // pred_check
        %p759 = pneg %p354
      $region90: #{encode_decode.1} parent=83 // pred_check_branch
        %761 = sbr.rel (%p759) target = $region92
      $region91: #{encode_decode.1} parent=83 // pred_region
        %s762 = smul.u32 2, %s27
        %p763 = scmp.lt.s32.totalorder %s762, 3
        %s764 = scalar_select %p763, %s762, 3
        %s765 = smul.addr %s764, 8
        %s766 = scalar_lea.vmem %s14, %s765
      $region92: #{encode_decode.1} parent=83 // pred_fallthru
        _
    $region84: #{encode_decode.1} parent=5 // pred_fallthru
      _
  $region6: #{encode_decode.1} parent=0 // loop_footer
    %s25 = sadd.s32 1, %s21
  $region7: #{encode_decode.1} parent=0 // loop_footer_branch
    %20 = sbr.rel target = $region3
  $region8: #{encode_decode.1} parent=0 // loop_exit
    _

</llo_original>
